<compile_context>
chip_gen: v7x
topology: tpu7x:2x2x1
jax: 0.10.0
libtpu: 0.0.40
codegen_flags: <defaults>
</compile_context>

<pallas_src>
import jax
import jax.numpy as jnp
from jax import lax
from jax.experimental import pallas as pl
from jax.experimental.pallas import tpu as pltpu

_TILE_TARGET_BYTES = 4 * 1024 * 1024      # ~4 MiB streamed per input per grid step
_ACC_ROWS = 8                             # small f32 accumulator sublane count


def _num_tensorcores():
    """TensorCores per chip: 2 on v7x (and v4/v5p megacore), else 1."""
    try:
        kind = jax.devices()[0].device_kind.lower()
    except Exception:
        return 1
    if "v7" in kind or "v4" in kind or "v5p" in kind:
        return 2
    return 1


def _choose_layout(n, itemsize, tile_bytes):
    """Return (lanes, tile_rows, splits, steps) for n elements."""
    lanes = 128
    for w in (1024, 512, 256, 128):
        if n % w == 0:
            lanes = w
            break
    rows = pl.cdiv(n, lanes)
    # Byte budget -> rows per tile; multiple of 32 covers f32/bf16/int8 tiling.
    target_rows = max(32, (tile_bytes // (lanes * itemsize)) // 32 * 32)
    if rows <= target_rows:
        return lanes, rows, 1, 1          # single block == full array dims
    tile_rows = target_rows
    blocks = pl.cdiv(rows, tile_rows)
    splits = _num_tensorcores() if blocks >= 2 else 1
    steps = pl.cdiv(blocks, splits)
    return lanes, tile_rows, splits, steps


def _make_kernel(rows, tile_rows, lanes, steps, needs_mask, acc_rows):
    def kernel(p_ref, t_ref, o_ref, acc_ref):
        step = pl.program_id(1)

        @pl.when(step == 0)
        def _():
            acc_ref[...] = jnp.zeros_like(acc_ref)

        p = p_ref[...].astype(jnp.float32)
        t = t_ref[...].astype(jnp.float32)

        if needs_mask:
            # Logical block id (unclamped): overrun blocks are fully masked,
            # the ragged boundary block is partially masked.  Mask is applied
            # before the subtract so boundary garbage never reaches the math.
            bid = pl.program_id(0) * steps + step
            row_start = bid * tile_rows
            row_ids = row_start + lax.broadcasted_iota(
                jnp.int32, (tile_rows, 1), 0)
            valid = row_ids < rows
            p = jnp.where(valid, p, 0.0)
            t = jnp.where(valid, t, 0.0)

        d = p - t
        dd = d * d
        # VPU-only grouped partial sum into the small (acc_rows, lanes) scratch.
        acc_ref[...] += dd.reshape(tile_rows // acc_rows, acc_rows, lanes).sum(axis=0)

        # One-shot epilogue: cross-lane reduce + scalar SMEM store at last step.
        @pl.when(step == pl.num_programs(1) - 1)
        def _():
            o_ref[0, 0] = jnp.sum(acc_ref[...])

    return kernel


def mse_loss(preds, target, *, tile_bytes=_TILE_TARGET_BYTES):
    assert preds.shape == target.shape, "preds/target shapes must match"
    n = preds.size
    itemsize = jnp.dtype(preds.dtype).itemsize
    lanes, tile_rows, splits, steps = _choose_layout(n, itemsize, tile_bytes)
    rows = pl.cdiv(n, lanes)

    def slab(x):
        flat = x.reshape(-1)                       # copy-free for contiguous inputs
        if rows * lanes != n:
            # TODO(synk): rare n % 128 != 0 tail; minimal pad still copies the
            # flattened array once.  Never triggers for lane-multiple sizes.
            flat = jnp.pad(flat, (0, rows * lanes - n))
        return flat.reshape(rows, lanes)

    p = slab(preds)
    t = slab(target)

    covered_rows = splits * steps * tile_rows
    needs_mask = covered_rows != rows
    acc_rows = _ACC_ROWS if tile_rows % _ACC_ROWS == 0 else tile_rows
    last_block = pl.cdiv(rows, tile_rows) - 1

    def row_block(c, i):
        # Clamp so overrun programs re-fetch the last real block (their
        # contribution is zeroed by the in-kernel mask) -> never DMAs OOB.
        return (jnp.minimum(c * steps + i, last_block), 0)

    kernel = _make_kernel(rows=rows, tile_rows=tile_rows, lanes=lanes,
                          steps=steps, needs_mask=needs_mask, acc_rows=acc_rows)

    partials = pl.pallas_call(
        kernel,
        out_shape=jax.ShapeDtypeStruct((splits, 1), jnp.float32),
        grid=(splits, steps),
        in_specs=[
            pl.BlockSpec((tile_rows, lanes), row_block),
            pl.BlockSpec((tile_rows, lanes), row_block),
        ],
        out_specs=pl.BlockSpec((1, 1), lambda c, i: (c, 0),
                               memory_space=pltpu.SMEM),
        scratch_shapes=[pltpu.VMEM((acc_rows, lanes), jnp.float32)],
        compiler_params=pltpu.CompilerParams(
            dimension_semantics=("parallel", "arbitrary"),
            vmem_limit_bytes=48 * 1024 * 1024),
        cost_estimate=pl.CostEstimate(
            flops=3 * n,
            transcendentals=0,
            bytes_accessed=2 * rows * lanes * itemsize + 4 * splits),
    )(p, t)

    # Mean over the true (unpadded) element count.
    # TODO(synk): torch computes a bf16 loss in bf16; we accumulate/return f32.
    return jnp.sum(partials) / jnp.float32(n)


if __name__ == "__main__":
    key = jax.random.PRNGKey(0)
    k1, k2, k3, k4, k5, k6 = jax.random.split(key, 6)

    # Small NCHW-style shapes consistent with a typical loss call.
    preds = jax.random.normal(k1, (2, 4, 16, 16), dtype=jnp.float32)
    target = jax.random.normal(k2, (2, 4, 16, 16), dtype=jnp.float32)
    loss = jax.block_until_ready(mse_loss(preds, target))
    ref = jnp.mean((preds - target) ** 2)
    assert jnp.allclose(loss, ref, rtol=1e-5, atol=1e-6), (loss, ref)

    # Larger input exercising the multi-step streaming path (no padding copy).
    p2 = jax.random.normal(k3, (8, 64, 64, 64), dtype=jnp.float32)
    t2 = jax.random.normal(k4, (8, 64, 64, 64), dtype=jnp.float32)
    loss2 = jax.block_until_ready(mse_loss(p2, t2))
    ref2 = jnp.mean((p2 - t2) ** 2)
    assert jnp.allclose(loss2, ref2, rtol=1e-4, atol=1e-6), (loss2, ref2)

    # Tiny forced tiles to exercise the ragged/overrun-block masking path.
    p3 = jax.random.normal(k5, (10, 4, 32, 32), dtype=jnp.float32)
    t3 = jax.random.normal(k6, (10, 4, 32, 32), dtype=jnp.float32)
    loss3 = jax.block_until_ready(mse_loss(p3, t3, tile_bytes=128 * 1024))
    ref3 = jnp.mean((p3 - t3) ** 2)
    assert jnp.allclose(loss3, ref3, rtol=1e-5, atol=1e-6), (loss3, ref3)

    print("KERNEL_OK")
</pallas_src>

<mosaic_0001>
module attributes {stable_mosaic.version = 11 : i64} {
  func.func @kernel(%arg0: i32, %arg1: i32, %arg2: memref<2x1024xf32, #tpu.memory_space<vmem>>, %arg3: memref<2x1024xf32, #tpu.memory_space<vmem>>, %arg4: memref<1x1xf32, #tpu.memory_space<smem>>, %arg5: memref<2x1024xf32, #tpu.memory_space<vmem>>) attributes {dimension_semantics = [#tpu.dimension_semantics<parallel>, #tpu.dimension_semantics<arbitrary>], iteration_bounds = array<i64: 1, 1>, scalar_prefetch = 0 : i64, scratch_operands = 1 : i64, tpu.core_type = #tpu.core_type<tc>, window_params = [{transform_indices = @transform_0, window_bounds = array<i64: 2, 1024>}, {transform_indices = @transform_1, window_bounds = array<i64: 2, 1024>}, {transform_indices = @transform_2, window_bounds = array<i64: 1, 1>}]} {
    %c0_i32 = arith.constant 0 : i32
    %0 = arith.cmpi eq, %arg1, %c0_i32 : i32
    %1 = arith.extui %0 : i1 to i32
    %c0_i32_0 = arith.constant 0 : i32
    %2 = arith.cmpi ne, %1, %c0_i32_0 : i32
    scf.if %2 {
      %cst_10 = arith.constant 0.000000e+00 : f32
      %15 = vector.broadcast %cst_10 : f32 to vector<2x1024xf32>
      %c0_11 = arith.constant 0 : index
      %c0_12 = arith.constant 0 : index
      %16 = vector.load %arg5[%c0_11, %c0_12] : memref<2x1024xf32, #tpu.memory_space<vmem>>, vector<2x1024xf32>
      tpu.vector_store %arg5[%c0_11, %c0_12], %15 {strides = array<i32>} : memref<2x1024xf32, #tpu.memory_space<vmem>>, vector<2x1024xf32>,
    } else {
    }
    %c0 = arith.constant 0 : index
    %c0_1 = arith.constant 0 : index
    %3 = vector.load %arg2[%c0, %c0_1] : memref<2x1024xf32, #tpu.memory_space<vmem>>, vector<2x1024xf32>
    %c0_2 = arith.constant 0 : index
    %c0_3 = arith.constant 0 : index
    %4 = vector.load %arg3[%c0_2, %c0_3] : memref<2x1024xf32, #tpu.memory_space<vmem>>, vector<2x1024xf32>
    %5 = arith.subf %3, %4 : vector<2x1024xf32>
    %6 = arith.mulf %5, %5 : vector<2x1024xf32>
    %c0_4 = arith.constant 0 : index
    %c0_5 = arith.constant 0 : index
    %7 = vector.load %arg5[%c0_4, %c0_5] : memref<2x1024xf32, #tpu.memory_space<vmem>>, vector<2x1024xf32>
    %8 = vector.shape_cast %6 : vector<2x1024xf32> to vector<1x2x1024xf32>
    %cst = arith.constant dense<0.000000e+00> : vector<2x1024xf32>
    %9 = vector.multi_reduction <add>, %8, %cst [0] : vector<1x2x1024xf32> to vector<2x1024xf32>
    %10 = arith.addf %7, %9 : vector<2x1024xf32>
    %c0_6 = arith.constant 0 : index
    %c0_7 = arith.constant 0 : index
    %11 = vector.load %arg5[%c0_6, %c0_7] : memref<2x1024xf32, #tpu.memory_space<vmem>>, vector<2x1024xf32>
    tpu.vector_store %arg5[%c0_6, %c0_7], %10 {strides = array<i32>} : memref<2x1024xf32, #tpu.memory_space<vmem>>, vector<2x1024xf32>,
    %c0_i32_8 = arith.constant 0 : i32
    %12 = arith.cmpi eq, %arg1, %c0_i32_8 : i32
    %13 = arith.extui %12 : i1 to i32
    %c0_i32_9 = arith.constant 0 : i32
    %14 = arith.cmpi ne, %13, %c0_i32_9 : i32
    scf.if %14 {
      %c0_10 = arith.constant 0 : index
      %c0_11 = arith.constant 0 : index
      %15 = vector.load %arg5[%c0_10, %c0_11] : memref<2x1024xf32, #tpu.memory_space<vmem>>, vector<2x1024xf32>
      %16 = vector.shape_cast %15 : vector<2x1024xf32> to vector<1x2x1024xf32>
      %cst_12 = arith.constant dense<0.000000e+00> : vector<1xf32>
      %17 = vector.multi_reduction <add>, %16, %cst_12 [1, 2] : vector<1x2x1024xf32> to vector<1xf32>
      %18 = vector.shape_cast %17 : vector<1xf32> to vector<1x1x1xf32>
      %19 = vector.extract %18[0, 0, 0] : f32 from vector<1x1x1xf32>
      %c0_13 = arith.constant 0 : index
      %c0_14 = arith.constant 0 : index
      %20 = memref.load %arg4[%c0_13, %c0_14] : memref<1x1xf32, #tpu.memory_space<smem>>
      memref.store %19, %arg4[%c0_13, %c0_14] : memref<1x1xf32, #tpu.memory_space<smem>>
    } else {
    }
    return
  }
  func.func @transform_0(%arg0: i32, %arg1: i32) -> (i32, i32) {
    %c1_i32 = arith.constant 1 : i32
    %0 = arith.muli %arg0, %c1_i32 : i32
    %1 = arith.addi %0, %arg1 : i32
    %c0_i32 = arith.constant 0 : i32
    %2 = arith.minsi %1, %c0_i32 : i32
    %c0_i32_0 = arith.constant 0 : i32
    %c0_i32_1 = arith.constant 0 : i32
    return %2, %c0_i32_0 : i32, i32
  }
  func.func @transform_1(%arg0: i32, %arg1: i32) -> (i32, i32) {
    %c1_i32 = arith.constant 1 : i32
    %0 = arith.muli %arg0, %c1_i32 : i32
    %1 = arith.addi %0, %arg1 : i32
    %c0_i32 = arith.constant 0 : i32
    %2 = arith.minsi %1, %c0_i32 : i32
    %c0_i32_0 = arith.constant 0 : i32
    %c0_i32_1 = arith.constant 0 : i32
    return %2, %c0_i32_0 : i32, i32
  }
  func.func @transform_2(%arg0: i32, %arg1: i32) -> (i32, i32) {
    %c0_i32 = arith.constant 0 : i32
    %c0_i32_0 = arith.constant 0 : i32
    return %arg0, %c0_i32 : i32, i32
  }
}

</mosaic_0001>

<llo_original>
// kernel: tpu_custom_call.1
$region0: #{tpu_custom_call.1}
  #allocation0 [shape = 'u32[]', space=smem, size = 0x4, offset = 0x4, fixed_abs, tag = 'smem constant byte address 0x4 - core index']
  #allocation1 [shape = 'u32[144,128]{1,0:T(1,128)}', space=vmem, size = 0x12000, scoped, tag = 'internal scratch']
  #allocation2 [shape = 'f32[2,1024]{1,0:T(2,128)}', space=vmem, size = 0x2000, scoped, tag = 'scratch operand']
  %s0 = inlined_call_operand.hbm [shape: f32[2,1024], index: 0, kind: input, shape index: {}]
  %s1 = inlined_call_operand.hbm [shape: f32[2,1024], index: 1, kind: input, shape index: {}]
  %s2 = inlined_call_operand.hbm [shape: f32[1,1], index: 2, kind: output, shape index: {}]
  %s3 = sld [smem:[#allocation0]]
  $region34: #{tpu_custom_call.1} parent=0
    _
  %s5 = ssub.s32 1, %s3
  %s6 = scalar_select 0, %s5, %s3
  $region1: #{tpu_custom_call.1} parent=0
    #allocation3 [shape = 'u8[8192]{0}', space=vmem, size = 0x2000, scoped, tag = 'input window, operand 0, single buffered']
    #allocation4 [shape = 's32[1]{0}', space=sflag, size = 0x4, scoped, tag = 'scoped memory for tpu_custom_call.1']
    #allocation5 [shape = 's32[1]{0}', space=sflag, size = 0x4, scoped, tag = 'scoped memory for tpu_custom_call.1']
    #allocation6 [shape = 'u8[8192]{0}', space=vmem, size = 0x2000, scoped, tag = 'input window, operand 1, single buffered']
    #allocation7 [shape = 's32[1]{0}', space=sflag, size = 0x4, scoped, tag = 'scoped memory for tpu_custom_call.1']
    #allocation8 [shape = 'u8[512]{0}', space=smem, size = 0x200, scoped, tag = 'output window, operand 0, single buffered']
    %7 = vsyncpa [#allocation4], 0
    %8 = vsyncpa [#allocation7], 0
    %9 = vsyncpa [#allocation5], 0
    // Predicated region
    $region2: #{tpu_custom_call.1} parent=1 // pred_check
      _
    $region3: #{tpu_custom_call.1} parent=1 // pred_check_branch
      %11 = sbr.rel (0) target = $region5
    $region4: #{tpu_custom_call.1} parent=1 // pred_region
      %s12 = sadd.s32 0, 0
      %p13 = scmp.lt.s32.totalorder %s12, 0
      %s14 = scalar_select %p13, %s12, 0
      %s16 = ssub.s32 256, 256
      %17 = vsyncadd [#allocation4], %s16
      %s18 = smul.addr %s14, 8
      %s19 = smul.addr %s18, 32
      %s20 = scalar_lea.hbm %s0, %s19
      %s22 = sshll.u32 [#allocation3], 4
      %s23 = int_to_ptr.vmem [resolvable:$true] %s22
      %25 = dma.hbm_to_vmem [thread:$0]  %s20, 256, %s23, [#allocation4]
    $region5: #{tpu_custom_call.1} parent=1 // pred_fallthru
      _
    // Predicated region
    $region6: #{tpu_custom_call.1} parent=1 // pred_check
      _
    $region7: #{tpu_custom_call.1} parent=1 // pred_check_branch
      %27 = sbr.rel (0) target = $region9
    $region8: #{tpu_custom_call.1} parent=1 // pred_region
      %s28 = sadd.s32 0, 0
      %p29 = scmp.lt.s32.totalorder %s28, 0
      %s30 = scalar_select %p29, %s28, 0
      %s32 = ssub.s32 256, 256
      %33 = vsyncadd [#allocation7], %s32
      %s34 = smul.addr %s30, 8
      %s35 = smul.addr %s34, 32
      %s36 = scalar_lea.hbm %s1, %s35
      %s38 = sshll.u32 [#allocation6], 4
      %s39 = int_to_ptr.vmem [resolvable:$true] %s38
      %41 = dma.hbm_to_vmem [thread:$0]  %s36, 256, %s39, [#allocation7]
    $region9: #{tpu_custom_call.1} parent=1 // pred_fallthru
      _
    // Predicated region
    $region10: #{tpu_custom_call.1} parent=1 // pred_check
      _
    $region11: #{tpu_custom_call.1} parent=1 // pred_check_branch
      %43 = sbr.rel (0) target = $region13
    $region12: #{tpu_custom_call.1} parent=1 // pred_region
      %44 = dma.done [#allocation4], 256
    $region13: #{tpu_custom_call.1} parent=1 // pred_fallthru
      _
    // Predicated region
    $region14: #{tpu_custom_call.1} parent=1 // pred_check
      _
    $region15: #{tpu_custom_call.1} parent=1 // pred_check_branch
      %46 = sbr.rel (0) target = $region17
    $region16: #{tpu_custom_call.1} parent=1 // pred_region
      %47 = dma.done [#allocation7], 256
    $region17: #{tpu_custom_call.1} parent=1 // pred_fallthru
      _
    %s48 = sadd.s32 0, 0
    %p49 = scmp.lt.s32.totalorder %s48, 0
    %s50 = scalar_select %p49, %s48, 0
    %s51 = sadd.s32 0, 0
    %p52 = scmp.lt.s32.totalorder %s51, 0
    %s53 = scalar_select %p52, %s51, 0
    %p54 = scmp.eq.s32.totalorder 0, 0
    // Predicated region
    $region18: #{tpu_custom_call.1} parent=1 // pred_check
      %p55 = pneg %p54
    $region19: #{tpu_custom_call.1} parent=1 // pred_check_branch
      %57 = sbr.rel (%p55) target = $region21
    $region20: #{tpu_custom_call.1} parent=1 // pred_region
      %58 = vst [vmem:[#allocation2] sm:$0xff] 0.0
      %59 = vst [vmem:[#allocation2 + $0x8] sm:$0xff] 0.0
    $region21: #{tpu_custom_call.1} parent=1 // pred_fallthru
      _
    %v60 = vld [vmem:[#allocation3] sm:$0xff]
    %v61 = vld [vmem:[#allocation3 + $0x8] sm:$0xff]
    %v62 = vld [vmem:[#allocation6] sm:$0xff]
    %v63 = vld [vmem:[#allocation6 + $0x8] sm:$0xff]
    %v64 = vsub.f32 %v60, %v62
    %v65 = vsub.f32 %v61, %v63
    %v66 = vmul.f32 %v64, %v64
    %v67 = vmul.f32 %v65, %v65
    %v68 = vld [vmem:[#allocation2] sm:$0xff]
    %v69 = vld [vmem:[#allocation2 + $0x8] sm:$0xff]
    %v70 = vadd.f32 %v66, 0.0
    %v71 = vadd.f32 %v67, 0.0
    %v72 = vadd.f32 %v68, %v70
    %v73 = vadd.f32 %v69, %v71
    %74 = vst [vmem:[#allocation2] sm:$0xff] %v72
    %75 = vst [vmem:[#allocation2 + $0x8] sm:$0xff] %v73
    // Predicated region
    $region22: #{tpu_custom_call.1} parent=1 // pred_check
      %p76 = pneg %p54
    $region23: #{tpu_custom_call.1} parent=1 // pred_check_branch
      %78 = sbr.rel (%p76) target = $region25
    $region24: #{tpu_custom_call.1} parent=1 // pred_region
      %v79 = vld [vmem:[#allocation2] sm:$0xff]
      %v80 = vld [vmem:[#allocation2 + $0x8] sm:$0xff]
      %v83 = vcombine.high %v79, %v79
      %v85 = vunpack.c.l.s4 1983009808
      %v86 = vunpack.c.0.s8 %v85
      %v87 = vlaneseq
      %v88 = vshrl.u32 %v87, 7
      %v89 = vsub.s32 %v86, %v88
      %v90 = vrot.slane %v79, %v89
      %v92 = vunpack.c.l.s4 1983009808
      %v93 = vunpack.c.0.s8 %v92
      %v94 = vlaneseq
      %v95 = vshrl.u32 %v94, 7
      %v96 = vsub.s32 %v93, %v95
      %v97 = vrot.slane %v83, %v96
      %v98 = vcombine.high %v90, %v90
      %v99 = vcombine.high %v97, %v97
      %v100 = vcombine.high %v80, %v80
      %v102 = vunpack.c.l.s4 1983009808
      %v103 = vunpack.c.0.s8 %v102
      %v104 = vlaneseq
      %v105 = vshrl.u32 %v104, 7
      %v106 = vsub.s32 %v103, %v105
      %v107 = vrot.slane %v80, %v106
      %v109 = vunpack.c.l.s4 1983009808
      %v110 = vunpack.c.0.s8 %v109
      %v111 = vlaneseq
      %v112 = vshrl.u32 %v111, 7
      %v113 = vsub.s32 %v110, %v112
      %v114 = vrot.slane %v100, %v113
      %v115 = vcombine.high %v107, %v107
      %v116 = vcombine.high %v114, %v114
      %vm125 = vcmask 1041408
      %v126 = vsel %vm125, %v90, 0.0
      %v127 = vsel %vm125, %v98, 0.0
      %v128 = vadd.f32 %v126, %v127
      %v129 = vsel %vm125, %v97, 0.0
      %v130 = vadd.f32 %v128, %v129
      %v131 = vsel %vm125, %v99, 0.0
      %v132 = vadd.f32 %v130, %v131
      %v133 = vsel %vm125, %v107, 0.0
      %v134 = vadd.f32 %v132, %v133
      %v135 = vsel %vm125, %v115, 0.0
      %v136 = vadd.f32 %v134, %v135
      %v137 = vsel %vm125, %v114, 0.0
      %v138 = vadd.f32 %v136, %v137
      %v139 = vsel %vm125, %v116, 0.0
      %v140 = vadd.f32 %v138, %v139
      %141 = vadd.xlane.f32.xlu0 %v140
      %v142 = vpop.xlane.xlu0 %141
      %v143 = vrot.slane %v142, 4
      %v144 = vadd.f32 %v142, %v143
      %v145 = vrot.slane %v144, 2
      %v146 = vadd.f32 %v144, %v145
      %v147 = vrot.slane %v146, 1
      %v148 = vadd.f32 %v146, %v147
      %s149 = vtos %v148
      %s150 = scalar_lea.smem [#allocation8], 0
      %151 = sst [smem:[%s150]] %s149
    $region25: #{tpu_custom_call.1} parent=1 // pred_fallthru
      _
    // Predicated region
    $region26: #{tpu_custom_call.1} parent=1 // pred_check
      _
    $region27: #{tpu_custom_call.1} parent=1 // pred_check_branch
      %153 = sbr.rel (0) target = $region29
    $region28: #{tpu_custom_call.1} parent=1 // pred_region
      %s155 = ssub.s32 16, 16
      %156 = vsyncadd [#allocation5], %s155
      %159 = dma.smem_to_hbm [#allocation8], 16, %s2, [#allocation5]
    $region29: #{tpu_custom_call.1} parent=1 // pred_fallthru
      _
    // Predicated region
    $region30: #{tpu_custom_call.1} parent=1 // pred_check
      _
    $region31: #{tpu_custom_call.1} parent=1 // pred_check_branch
      %161 = sbr.rel (0) target = $region33
    $region32: #{tpu_custom_call.1} parent=1 // pred_region
      %162 = dma.done [#allocation5], 16
    $region33: #{tpu_custom_call.1} parent=1 // pred_fallthru
      _
    %163 = sfence
    %164 = vsyncpa [#allocation4], 1
    %165 = vsyncpa [#allocation7], 1
    %166 = vsyncpa [#allocation5], 1

</llo_original>
